<compile_context>
chip_gen: v7x
topology: tpu7x:2x2x1
jax: 0.10.0
libtpu: 0.0.40
codegen_flags: <defaults>
</compile_context>

<pallas_src>
import jax
import jax.numpy as jnp
from jax.experimental import pallas as pl
from jax.experimental.pallas import tpu as pltpu


# ---- packed-slab layout (rows; every block starts on a sublane multiple) ----
LANES = 128
ROW_W1 = 0       # (128, 128)  W1[:E] zero-padded (maps latent -> h1)
ROW_BEMB = 128   # (1, 128)    embedder bias, zero-padded
ROW_B1 = 136     # (1, 128)    b1_eff = b1 + budget * W1[E], zero-padded
ROW_B2 = 144     # (1, 128)    b2, zero-padded
ROW_B3 = 152     # (1, 128)    b3, zero-padded
ROW_W2 = 160     # (128, 128)  W2 zero-padded
ROW_W3 = 288     # (128, 128)  W3 zero-padded
SLAB_ROWS = 416


def painter_kernel(x_ref, wemb_ref, slab_ref, out_ref):
    # image embedder: flatten + Linear (bf16 inputs, f32 MXU accumulation)
    latent = jnp.dot(x_ref[...], wemb_ref[...],
                     preferred_element_type=jnp.float32)
    latent = latent + slab_ref[ROW_BEMB:ROW_BEMB + 1, :]

    # chooser layer 1: concat-with-budget already folded into the bias row.
    h1 = jnp.maximum(
        jnp.dot(latent, slab_ref[ROW_W1:ROW_W1 + LANES, :],
                preferred_element_type=jnp.float32)
        + slab_ref[ROW_B1:ROW_B1 + 1, :], 0.0)
    h2 = jnp.maximum(
        jnp.dot(h1, slab_ref[ROW_W2:ROW_W2 + LANES, :],
                preferred_element_type=jnp.float32)
        + slab_ref[ROW_B2:ROW_B2 + 1, :], 0.0)
    out_ref[...] = (
        jnp.dot(h2, slab_ref[ROW_W3:ROW_W3 + LANES, :],
                preferred_element_type=jnp.float32)
        + slab_ref[ROW_B3:ROW_B3 + 1, :])


def prepare_painter_params(wemb, bemb, w1, b1, w2, b2, w3, b3, *, budget):
    """Pack params into (wemb_p bf16 lane-padded, one f32 weight slab)."""
    F, E = wemb.shape
    H1 = w2.shape[0]
    H2, A = w3.shape
    assert w1.shape == (E + 1, H1)
    assert max(E, H1, H2, A) <= LANES

    wemb_p = jnp.zeros((F, LANES), jnp.bfloat16)
    wemb_p = wemb_p.at[:, :E].set(wemb.astype(jnp.bfloat16))

    w1a, w1b = w1[:E], w1[E:E + 1]
    b1_eff = b1 + jnp.float32(budget) * w1b  # fold budget-concat column

    slab = jnp.zeros((SLAB_ROWS, LANES), jnp.float32)
    slab = slab.at[ROW_W1:ROW_W1 + E, :H1].set(w1a)
    slab = slab.at[ROW_BEMB, :E].set(bemb.reshape(-1))
    slab = slab.at[ROW_B1, :H1].set(b1_eff.reshape(-1))
    slab = slab.at[ROW_B2, :H2].set(b2.reshape(-1))
    slab = slab.at[ROW_B3, :A].set(b3.reshape(-1))
    slab = slab.at[ROW_W2:ROW_W2 + H1, :H2].set(w2)
    slab = slab.at[ROW_W3:ROW_W3 + H2, :A].set(w3)
    return wemb_p, slab


def painter_forward(image_nchw, wemb_p, slab, *, n_actions):
    B = image_nchw.shape[0]
    F = wemb_p.shape[0]
    BP = max(8, pl.cdiv(B, 8) * 8)           # pad batch to f32 sublane minimum

    x = image_nchw.reshape(B, -1).astype(jnp.bfloat16)   # flatten NCHW (glue)
    x_pad = jnp.zeros((BP, F), jnp.bfloat16).at[:B].set(x)

    vmem = pl.BlockSpec(memory_space=pltpu.MemorySpace.VMEM)
    out_pad = pl.pallas_call(
        painter_kernel,
        out_shape=jax.ShapeDtypeStruct((BP, LANES), jnp.float32),
        in_specs=[vmem, vmem, vmem],
        out_specs=vmem,
    )(x_pad, wemb_p, slab)
    return out_pad[:B, :n_actions]


def painter_reference(image_nchw, wemb, bemb, w1, b1, w2, b2, w3, b3, *,
                      budget):
    """Plain-JAX reference of the torch semantics (full f32)."""
    B = image_nchw.shape[0]
    x_flat = image_nchw.reshape(B, -1)
    latent = x_flat @ wemb + bemb
    budget_col = jnp.full((B, 1), float(budget), jnp.float32)
    x = jnp.concatenate([latent, budget_col], axis=-1)
    out = None
    for _ in range(budget):                   # loop-invariant, kept for spec
        h1 = jnp.maximum(x @ w1 + b1, 0.0)
        h2 = jnp.maximum(h1 @ w2 + b2, 0.0)
        out = h2 @ w3 + b3
    return out


if __name__ == "__main__":
    # small shapes consistent with the module
    B, C, H, W = 2, 4, 16, 16           # image: (batch, channels, height, width)
    img_emb_dim = 32
    chooser_dims = (32, 16)             # MLP hidden dims
    n_actions = 7
    budget = 5

    F = C * H * W
    key = jax.random.PRNGKey(0)
    ks = jax.random.split(key, 10)

    image = jax.random.normal(ks[0], (B, C, H, W), jnp.float32)

    # deterministic synthetic parameters
    wemb = jax.random.normal(ks[1], (F, img_emb_dim), jnp.float32) * 0.02
    bemb = jax.random.normal(ks[2], (1, img_emb_dim), jnp.float32) * 0.02
    w1 = jax.random.normal(ks[3], (img_emb_dim + 1, chooser_dims[0]),
                           jnp.float32) * 0.1
    b1 = jax.random.normal(ks[4], (1, chooser_dims[0]), jnp.float32) * 0.1
    w2 = jax.random.normal(ks[5], (chooser_dims[0], chooser_dims[1]),
                           jnp.float32) * 0.1
    b2 = jax.random.normal(ks[6], (1, chooser_dims[1]), jnp.float32) * 0.1
    w3 = jax.random.normal(ks[7], (chooser_dims[1], n_actions),
                           jnp.float32) * 0.1
    b3 = jax.random.normal(ks[8], (1, n_actions), jnp.float32) * 0.1

    wemb_p, slab = prepare_painter_params(wemb, bemb, w1, b1, w2, b2, w3, b3,
                                          budget=budget)

    out = painter_forward(image, wemb_p, slab, n_actions=n_actions)
    out = jax.block_until_ready(out)

    ref = painter_reference(image, wemb, bemb, w1, b1, w2, b2, w3, b3,
                            budget=budget)
    assert out.shape == (B, n_actions)
    # tolerance covers the intentional bf16 cast of the embedder inputs
    assert jnp.allclose(out, ref, atol=1e-2, rtol=1e-2), (
        float(jnp.max(jnp.abs(out - ref))))

    print("KERNEL_OK")
</pallas_src>

<mosaic_0001>
module attributes {stable_mosaic.version = 11 : i64} {
  func.func @painter_kernel(%arg0: memref<8x1024xbf16, #tpu.memory_space<vmem>>, %arg1: memref<1024x128xbf16, #tpu.memory_space<vmem>>, %arg2: memref<416x128xf32, #tpu.memory_space<vmem>>, %arg3: memref<8x128xf32, #tpu.memory_space<vmem>>) attributes {dimension_semantics = [], scalar_prefetch = 0 : i64, scratch_operands = 0 : i64, tpu.core_type = #tpu.core_type<tc>} {
    %c0 = arith.constant 0 : index
    %c0_0 = arith.constant 0 : index
    %0 = vector.load %arg0[%c0, %c0_0] : memref<8x1024xbf16, #tpu.memory_space<vmem>>, vector<8x1024xbf16>
    %c0_1 = arith.constant 0 : index
    %c0_2 = arith.constant 0 : index
    %1 = vector.load %arg1[%c0_1, %c0_2] : memref<1024x128xbf16, #tpu.memory_space<vmem>>, vector<1024x128xbf16>
    %cst = arith.constant dense<0.000000e+00> : vector<8x128xf32>
    %2 = tpu.matmul %0, %1, %cst {dimension_numbers = #tpu.dot_dimension_numbers<[1], [0], [0], [1], [0, 0, 1, 1], [], []>} : vector<8x1024xbf16>, vector<1024x128xbf16>, vector<8x128xf32> -> vector<8x128xf32>
    %c128 = arith.constant 128 : index
    %c0_3 = arith.constant 0 : index
    %3 = vector.load %arg2[%c128, %c0_3] : memref<416x128xf32, #tpu.memory_space<vmem>>, vector<1x128xf32>
    %4 = vector.broadcast %3 : vector<1x128xf32> to vector<8x128xf32>
    %5 = arith.addf %2, %4 : vector<8x128xf32>
    %c0_4 = arith.constant 0 : index
    %c0_5 = arith.constant 0 : index
    %6 = vector.load %arg2[%c0_4, %c0_5] : memref<416x128xf32, #tpu.memory_space<vmem>>, vector<128x128xf32>
    %cst_6 = arith.constant dense<0.000000e+00> : vector<8x128xf32>
    %7 = tpu.matmul %5, %6, %cst_6 {dimension_numbers = #tpu.dot_dimension_numbers<[1], [0], [0], [1], [0, 0, 1, 1], [], []>} : vector<8x128xf32>, vector<128x128xf32>, vector<8x128xf32> -> vector<8x128xf32>
    %c136 = arith.constant 136 : index
    %c0_7 = arith.constant 0 : index
    %8 = vector.load %arg2[%c136, %c0_7] : memref<416x128xf32, #tpu.memory_space<vmem>>, vector<1x128xf32>
    %9 = vector.broadcast %8 : vector<1x128xf32> to vector<8x128xf32>
    %10 = arith.addf %7, %9 : vector<8x128xf32>
    %cst_8 = arith.constant 0.000000e+00 : f32
    %11 = vector.broadcast %cst_8 : f32 to vector<8x128xf32>
    %12 = arith.maximumf %10, %11 : vector<8x128xf32>
    %c160 = arith.constant 160 : index
    %c0_9 = arith.constant 0 : index
    %13 = vector.load %arg2[%c160, %c0_9] : memref<416x128xf32, #tpu.memory_space<vmem>>, vector<128x128xf32>
    %cst_10 = arith.constant dense<0.000000e+00> : vector<8x128xf32>
    %14 = tpu.matmul %12, %13, %cst_10 {dimension_numbers = #tpu.dot_dimension_numbers<[1], [0], [0], [1], [0, 0, 1, 1], [], []>} : vector<8x128xf32>, vector<128x128xf32>, vector<8x128xf32> -> vector<8x128xf32>
    %c144 = arith.constant 144 : index
    %c0_11 = arith.constant 0 : index
    %15 = vector.load %arg2[%c144, %c0_11] : memref<416x128xf32, #tpu.memory_space<vmem>>, vector<1x128xf32>
    %16 = vector.broadcast %15 : vector<1x128xf32> to vector<8x128xf32>
    %17 = arith.addf %14, %16 : vector<8x128xf32>
    %cst_12 = arith.constant 0.000000e+00 : f32
    %18 = vector.broadcast %cst_12 : f32 to vector<8x128xf32>
    %19 = arith.maximumf %17, %18 : vector<8x128xf32>
    %c288 = arith.constant 288 : index
    %c0_13 = arith.constant 0 : index
    %20 = vector.load %arg2[%c288, %c0_13] : memref<416x128xf32, #tpu.memory_space<vmem>>, vector<128x128xf32>
    %cst_14 = arith.constant dense<0.000000e+00> : vector<8x128xf32>
    %21 = tpu.matmul %19, %20, %cst_14 {dimension_numbers = #tpu.dot_dimension_numbers<[1], [0], [0], [1], [0, 0, 1, 1], [], []>} : vector<8x128xf32>, vector<128x128xf32>, vector<8x128xf32> -> vector<8x128xf32>
    %c152 = arith.constant 152 : index
    %c0_15 = arith.constant 0 : index
    %22 = vector.load %arg2[%c152, %c0_15] : memref<416x128xf32, #tpu.memory_space<vmem>>, vector<1x128xf32>
    %23 = vector.broadcast %22 : vector<1x128xf32> to vector<8x128xf32>
    %24 = arith.addf %21, %23 : vector<8x128xf32>
    %c0_16 = arith.constant 0 : index
    %c0_17 = arith.constant 0 : index
    %25 = vector.load %arg3[%c0_16, %c0_17] : memref<8x128xf32, #tpu.memory_space<vmem>>, vector<8x128xf32>
    tpu.vector_store %arg3[%c0_16, %c0_17], %24 {strides = array<i32>} : memref<8x128xf32, #tpu.memory_space<vmem>>, vector<8x128xf32>,
    return
  }
}

</mosaic_0001>

<llo_original>
// kernel: tpu_custom_call.1
$region0: #{tpu_custom_call.1}
  #allocation0 [shape = 'u32[]', space=smem, size = 0x4, offset = 0x4, fixed_abs, tag = 'smem constant byte address 0x4 - core index']
  #allocation1 [shape = 'u32[144,128]{1,0:T(1,128)}', space=vmem, size = 0x12000, scoped, tag = 'internal scratch']
  %s0 = inlined_call_operand.hbm [shape: bf16[8,1024], index: 0, kind: input, shape index: {}]
  %s1 = inlined_call_operand.hbm [shape: bf16[1024,128], index: 1, kind: input, shape index: {}]
  %s2 = inlined_call_operand.hbm [shape: f32[416,128], index: 2, kind: input, shape index: {}]
  %s3 = inlined_call_operand.hbm [shape: f32[8,128], index: 3, kind: output, shape index: {}]
  %s4 = sld [smem:[#allocation0]]
  $region34: #{tpu_custom_call.1} parent=0
    _
  %s6 = ssub.s32 1, %s4
  %s7 = scalar_select 0, %s6, %s4
  $region1: #{tpu_custom_call.1} parent=0
    #allocation2 [shape = 'u8[16384]{0}', space=vmem, size = 0x4000, scoped, tag = 'input window, operand 0, single buffered']
    #allocation3 [shape = 's32[1]{0}', space=sflag, size = 0x4, scoped, tag = 'scoped memory for tpu_custom_call.1']
    #allocation4 [shape = 's32[1]{0}', space=sflag, size = 0x4, scoped, tag = 'scoped memory for tpu_custom_call.1']
    #allocation5 [shape = 'u8[262144]{0}', space=vmem, size = 0x40000, scoped, tag = 'input window, operand 1, single buffered']
    #allocation6 [shape = 's32[1]{0}', space=sflag, size = 0x4, scoped, tag = 'scoped memory for tpu_custom_call.1']
    #allocation7 [shape = 'u8[212992]{0}', space=vmem, size = 0x34000, scoped, tag = 'input window, operand 2, single buffered']
    #allocation8 [shape = 'u8[4096]{0}', space=vmem, size = 0x1000, scoped, tag = 'output window, operand 0, single buffered']
    %8 = vsyncpa [#allocation3], 0
    %9 = vsyncpa [#allocation6], 0
    %10 = vsyncpa [#allocation4], 0
    // Predicated region
    $region2: #{tpu_custom_call.1} parent=1 // pred_check
      _
    $region3: #{tpu_custom_call.1} parent=1 // pred_check_branch
      %12 = sbr.rel (0) target = $region5
    $region4: #{tpu_custom_call.1} parent=1 // pred_region
      %s14 = ssub.s32 512, 512
      %15 = vsyncadd [#allocation3], %s14
      %s17 = sshll.u32 [#allocation2], 4
      %s18 = int_to_ptr.vmem [resolvable:$true] %s17
      %20 = dma.hbm_to_vmem [thread:$0]  %s0, 512, %s18, [#allocation3]
    $region5: #{tpu_custom_call.1} parent=1 // pred_fallthru
      _
    // Predicated region
    $region6: #{tpu_custom_call.1} parent=1 // pred_check
      _
    $region7: #{tpu_custom_call.1} parent=1 // pred_check_branch
      %22 = sbr.rel (0) target = $region9
    $region8: #{tpu_custom_call.1} parent=1 // pred_region
      %s24 = ssub.s32 8192, 8192
      %25 = vsyncadd [#allocation6], %s24
      %s26 = sshll.u32 [#allocation5], 4
      %s27 = int_to_ptr.vmem [resolvable:$true] %s26
      %32 = dma.hbm_to_vmem [thread:$0]  %s1, 8192, %s27, [#allocation6], 64, 64, 4
    $region9: #{tpu_custom_call.1} parent=1 // pred_fallthru
      _
    // Predicated region
    $region10: #{tpu_custom_call.1} parent=1 // pred_check
      _
    $region11: #{tpu_custom_call.1} parent=1 // pred_check_branch
      %34 = sbr.rel (0) target = $region13
    $region12: #{tpu_custom_call.1} parent=1 // pred_region
      %s36 = ssub.s32 6656, 6656
      %37 = vsyncadd [#allocation6], %s36
      %s38 = sshll.u32 [#allocation7], 4
      %s39 = int_to_ptr.vmem [resolvable:$true] %s38
      %44 = dma.hbm_to_vmem [thread:$0]  %s2, 6656, %s39, [#allocation6], 128, 128, 8
    $region13: #{tpu_custom_call.1} parent=1 // pred_fallthru
      _
    // Predicated region
    $region14: #{tpu_custom_call.1} parent=1 // pred_check
      _
    $region15: #{tpu_custom_call.1} parent=1 // pred_check_branch
      %46 = sbr.rel (0) target = $region17
    $region16: #{tpu_custom_call.1} parent=1 // pred_region
      %47 = dma.done [#allocation3], 512
    $region17: #{tpu_custom_call.1} parent=1 // pred_fallthru
      _
    // Predicated region
    $region18: #{tpu_custom_call.1} parent=1 // pred_check
      _
    $region19: #{tpu_custom_call.1} parent=1 // pred_check_branch
      %49 = sbr.rel (0) target = $region21
    $region20: #{tpu_custom_call.1} parent=1 // pred_region
      %50 = dma.done [#allocation6], 8192
    $region21: #{tpu_custom_call.1} parent=1 // pred_fallthru
      _
    // Predicated region
    $region22: #{tpu_custom_call.1} parent=1 // pred_check
      _
    $region23: #{tpu_custom_call.1} parent=1 // pred_check_branch
      %52 = sbr.rel (0) target = $region25
    $region24: #{tpu_custom_call.1} parent=1 // pred_region
      %53 = dma.done [#allocation6], 6656
    $region25: #{tpu_custom_call.1} parent=1 // pred_fallthru
      _
    %v55 = vld [vmem:[#allocation2] sm:$0xff]
    %v56 = vld [vmem:[#allocation2 + $0x8] sm:$0xff]
    %v57 = vld [vmem:[#allocation2 + $0x10] sm:$0xff]
    %v58 = vld [vmem:[#allocation2 + $0x18] sm:$0xff]
    %v59 = vld [vmem:[#allocation5] sm:$0xf]
    %v60 = vld [vmem:[#allocation5 + $0x4] sm:$0xf]
    %v61 = vld [vmem:[#allocation5 + $0x8] sm:$0xf]
    %v62 = vld [vmem:[#allocation5 + $0xc] sm:$0xf]
    %v63 = vld [vmem:[#allocation5 + $0x10] sm:$0xf]
    %v64 = vld [vmem:[#allocation5 + $0x14] sm:$0xf]
    %v65 = vld [vmem:[#allocation5 + $0x18] sm:$0xf]
    %v66 = vld [vmem:[#allocation5 + $0x1c] sm:$0xf]
    %v67 = vld [vmem:[#allocation5 + $0x20] sm:$0xf]
    %v68 = vld [vmem:[#allocation5 + $0x24] sm:$0xf]
    %v69 = vld [vmem:[#allocation5 + $0x28] sm:$0xf]
    %v70 = vld [vmem:[#allocation5 + $0x2c] sm:$0xf]
    %v71 = vld [vmem:[#allocation5 + $0x30] sm:$0xf]
    %v72 = vld [vmem:[#allocation5 + $0x34] sm:$0xf]
    %v73 = vld [vmem:[#allocation5 + $0x38] sm:$0xf]
    %v74 = vld [vmem:[#allocation5 + $0x3c] sm:$0xf]
    %v75 = vld [vmem:[#allocation5 + $0x40] sm:$0xf]
    %v76 = vld [vmem:[#allocation5 + $0x44] sm:$0xf]
    %v77 = vld [vmem:[#allocation5 + $0x48] sm:$0xf]
    %v78 = vld [vmem:[#allocation5 + $0x4c] sm:$0xf]
    %v79 = vld [vmem:[#allocation5 + $0x50] sm:$0xf]
    %v80 = vld [vmem:[#allocation5 + $0x54] sm:$0xf]
    %v81 = vld [vmem:[#allocation5 + $0x58] sm:$0xf]
    %v82 = vld [vmem:[#allocation5 + $0x5c] sm:$0xf]
    %v83 = vld [vmem:[#allocation5 + $0x60] sm:$0xf]
    %v84 = vld [vmem:[#allocation5 + $0x64] sm:$0xf]
    %v85 = vld [vmem:[#allocation5 + $0x68] sm:$0xf]
    %v86 = vld [vmem:[#allocation5 + $0x6c] sm:$0xf]
    %v87 = vld [vmem:[#allocation5 + $0x70] sm:$0xf]
    %v88 = vld [vmem:[#allocation5 + $0x74] sm:$0xf]
    %v89 = vld [vmem:[#allocation5 + $0x78] sm:$0xf]
    %v90 = vld [vmem:[#allocation5 + $0x7c] sm:$0xf]
    %v91 = vld [vmem:[#allocation5 + $0x80] sm:$0xf]
    %v92 = vld [vmem:[#allocation5 + $0x84] sm:$0xf]
    %v93 = vld [vmem:[#allocation5 + $0x88] sm:$0xf]
    %v94 = vld [vmem:[#allocation5 + $0x8c] sm:$0xf]
    %v95 = vld [vmem:[#allocation5 + $0x90] sm:$0xf]
    %v96 = vld [vmem:[#allocation5 + $0x94] sm:$0xf]
    %v97 = vld [vmem:[#allocation5 + $0x98] sm:$0xf]
    %v98 = vld [vmem:[#allocation5 + $0x9c] sm:$0xf]
    %v99 = vld [vmem:[#allocation5 + $0xa0] sm:$0xf]
    %v100 = vld [vmem:[#allocation5 + $0xa4] sm:$0xf]
    %v101 = vld [vmem:[#allocation5 + $0xa8] sm:$0xf]
    %v102 = vld [vmem:[#allocation5 + $0xac] sm:$0xf]
    %v103 = vld [vmem:[#allocation5 + $0xb0] sm:$0xf]
    %v104 = vld [vmem:[#allocation5 + $0xb4] sm:$0xf]
    %v105 = vld [vmem:[#allocation5 + $0xb8] sm:$0xf]
    %v106 = vld [vmem:[#allocation5 + $0xbc] sm:$0xf]
    %v107 = vld [vmem:[#allocation5 + $0xc0] sm:$0xf]
    %v108 = vld [vmem:[#allocation5 + $0xc4] sm:$0xf]
    %v109 = vld [vmem:[#allocation5 + $0xc8] sm:$0xf]
    %v110 = vld [vmem:[#allocation5 + $0xcc] sm:$0xf]
    %v111 = vld [vmem:[#allocation5 + $0xd0] sm:$0xf]
    %v112 = vld [vmem:[#allocation5 + $0xd4] sm:$0xf]
    %v113 = vld [vmem:[#allocation5 + $0xd8] sm:$0xf]
    %v114 = vld [vmem:[#allocation5 + $0xdc] sm:$0xf]
    %v115 = vld [vmem:[#allocation5 + $0xe0] sm:$0xf]
    %v116 = vld [vmem:[#allocation5 + $0xe4] sm:$0xf]
    %v117 = vld [vmem:[#allocation5 + $0xe8] sm:$0xf]
    %v118 = vld [vmem:[#allocation5 + $0xec] sm:$0xf]
    %v119 = vld [vmem:[#allocation5 + $0xf0] sm:$0xf]
    %v120 = vld [vmem:[#allocation5 + $0xf4] sm:$0xf]
    %v121 = vld [vmem:[#allocation5 + $0xf8] sm:$0xf]
    %v122 = vld [vmem:[#allocation5 + $0xfc] sm:$0xf]
    %v123 = vld [vmem:[#allocation5 + $0x100] sm:$0xf]
    %v124 = vld [vmem:[#allocation5 + $0x104] sm:$0xf]
    %v125 = vld [vmem:[#allocation5 + $0x108] sm:$0xf]
    %v126 = vld [vmem:[#allocation5 + $0x10c] sm:$0xf]
    %v127 = vld [vmem:[#allocation5 + $0x110] sm:$0xf]
    %v128 = vld [vmem:[#allocation5 + $0x114] sm:$0xf]
    %v129 = vld [vmem:[#allocation5 + $0x118] sm:$0xf]
    %v130 = vld [vmem:[#allocation5 + $0x11c] sm:$0xf]
    %v131 = vld [vmem:[#allocation5 + $0x120] sm:$0xf]
    %v132 = vld [vmem:[#allocation5 + $0x124] sm:$0xf]
    %v133 = vld [vmem:[#allocation5 + $0x128] sm:$0xf]
    %v134 = vld [vmem:[#allocation5 + $0x12c] sm:$0xf]
    %v135 = vld [vmem:[#allocation5 + $0x130] sm:$0xf]
    %v136 = vld [vmem:[#allocation5 + $0x134] sm:$0xf]
    %v137 = vld [vmem:[#allocation5 + $0x138] sm:$0xf]
    %v138 = vld [vmem:[#allocation5 + $0x13c] sm:$0xf]
    %v139 = vld [vmem:[#allocation5 + $0x140] sm:$0xf]
    %v140 = vld [vmem:[#allocation5 + $0x144] sm:$0xf]
    %v141 = vld [vmem:[#allocation5 + $0x148] sm:$0xf]
    %v142 = vld [vmem:[#allocation5 + $0x14c] sm:$0xf]
    %v143 = vld [vmem:[#allocation5 + $0x150] sm:$0xf]
    %v144 = vld [vmem:[#allocation5 + $0x154] sm:$0xf]
    %v145 = vld [vmem:[#allocation5 + $0x158] sm:$0xf]
    %v146 = vld [vmem:[#allocation5 + $0x15c] sm:$0xf]
    %v147 = vld [vmem:[#allocation5 + $0x160] sm:$0xf]
    %v148 = vld [vmem:[#allocation5 + $0x164] sm:$0xf]
    %v149 = vld [vmem:[#allocation5 + $0x168] sm:$0xf]
    %v150 = vld [vmem:[#allocation5 + $0x16c] sm:$0xf]
    %v151 = vld [vmem:[#allocation5 + $0x170] sm:$0xf]
    %v152 = vld [vmem:[#allocation5 + $0x174] sm:$0xf]
    %v153 = vld [vmem:[#allocation5 + $0x178] sm:$0xf]
    %v154 = vld [vmem:[#allocation5 + $0x17c] sm:$0xf]
    %v155 = vld [vmem:[#allocation5 + $0x180] sm:$0xf]
    %v156 = vld [vmem:[#allocation5 + $0x184] sm:$0xf]
    %v157 = vld [vmem:[#allocation5 + $0x188] sm:$0xf]
    %v158 = vld [vmem:[#allocation5 + $0x18c] sm:$0xf]
    %v159 = vld [vmem:[#allocation5 + $0x190] sm:$0xf]
    %v160 = vld [vmem:[#allocation5 + $0x194] sm:$0xf]
    %v161 = vld [vmem:[#allocation5 + $0x198] sm:$0xf]
    %v162 = vld [vmem:[#allocation5 + $0x19c] sm:$0xf]
    %v163 = vld [vmem:[#allocation5 + $0x1a0] sm:$0xf]
    %v164 = vld [vmem:[#allocation5 + $0x1a4] sm:$0xf]
    %v165 = vld [vmem:[#allocation5 + $0x1a8] sm:$0xf]
    %v166 = vld [vmem:[#allocation5 + $0x1ac] sm:$0xf]
    %v167 = vld [vmem:[#allocation5 + $0x1b0] sm:$0xf]
    %v168 = vld [vmem:[#allocation5 + $0x1b4] sm:$0xf]
    %v169 = vld [vmem:[#allocation5 + $0x1b8] sm:$0xf]
    %v170 = vld [vmem:[#allocation5 + $0x1bc] sm:$0xf]
    %v171 = vld [vmem:[#allocation5 + $0x1c0] sm:$0xf]
    %v172 = vld [vmem:[#allocation5 + $0x1c4] sm:$0xf]
    %v173 = vld [vmem:[#allocation5 + $0x1c8] sm:$0xf]
    %v174 = vld [vmem:[#allocation5 + $0x1cc] sm:$0xf]
    %v175 = vld [vmem:[#allocation5 + $0x1d0] sm:$0xf]
    %v176 = vld [vmem:[#allocation5 + $0x1d4] sm:$0xf]
    %v177 = vld [vmem:[#allocation5 + $0x1d8] sm:$0xf]
    %v178 = vld [vmem:[#allocation5 + $0x1dc] sm:$0xf]
    %v179 = vld [vmem:[#allocation5 + $0x1e0] sm:$0xf]
    %v180 = vld [vmem:[#allocation5 + $0x1e4] sm:$0xf]
    %v181 = vld [vmem:[#allocation5 + $0x1e8] sm:$0xf]
    %v182 = vld [vmem:[#allocation5 + $0x1ec] sm:$0xf]
    %v183 = vld [vmem:[#allocation5 + $0x1f0] sm:$0xf]
    %v184 = vld [vmem:[#allocation5 + $0x1f4] sm:$0xf]
    %v185 = vld [vmem:[#allocation5 + $0x1f8] sm:$0xf]
    %v186 = vld [vmem:[#allocation5 + $0x1fc] sm:$0xf]
    %v187 = vld [vmem:[#allocation7 + $0x80] sm:$0x1]
    %v188 = vlaneseq
    %v189 = vshrl.u32 %v188, 7
    %v190 = vsub.s32 0, %v189
    %v191 = vrot.slane %v187, %v190
    %v196 = vunpack.c.l.b16 %v55
    %v197 = vunpack.c.h.b16 %v55
    %v198 = vunpack.c.l.b16 %v56
    %v199 = vunpack.c.h.b16 %v56
    %v200 = vunpack.c.l.b16 %v57
    %v201 = vunpack.c.h.b16 %v57
    %v202 = vunpack.c.l.b16 %v58
    %v203 = vunpack.c.h.b16 %v58
    %v204 = vpack.c.b16 %v196, %v196
    %v205 = vpack.c.b16 %v197, %v197
    %v206 = vpack.c.b16 %v198, %v198
    %v207 = vpack.c.b16 %v199, %v199
    %v208 = vpack.c.b16 %v200, %v200
    %v209 = vpack.c.b16 %v201, %v201
    %v210 = vpack.c.b16 %v202, %v202
    %v211 = vpack.c.b16 %v203, %v203
    %v348 = vunpack.c.l.b16 %v59
    %v349 = vunpack.c.l.b16 %v60
    %v350 = vunpack.c.l.b16 %v61
    %v351 = vunpack.c.l.b16 %v62
    %v352 = vunpack.c.l.b16 %v63
    %v353 = vunpack.c.l.b16 %v64
    %v354 = vunpack.c.l.b16 %v65
    %v355 = vunpack.c.l.b16 %v66
    %v356 = vunpack.c.l.b16 %v67
    %v357 = vunpack.c.l.b16 %v68
    %v358 = vunpack.c.l.b16 %v69
    %v359 = vunpack.c.l.b16 %v70
    %v360 = vunpack.c.l.b16 %v71
    %v361 = vunpack.c.l.b16 %v72
    %v362 = vunpack.c.l.b16 %v73
    %v363 = vunpack.c.l.b16 %v74
    %v364 = vunpack.c.l.b16 %v75
    %v365 = vunpack.c.l.b16 %v76
    %v366 = vunpack.c.l.b16 %v77
    %v367 = vunpack.c.l.b16 %v78
    %v368 = vunpack.c.l.b16 %v79
    %v369 = vunpack.c.l.b16 %v80
    %v370 = vunpack.c.l.b16 %v81
    %v371 = vunpack.c.l.b16 %v82
    %v372 = vunpack.c.l.b16 %v83
    %v373 = vunpack.c.l.b16 %v84
    %v374 = vunpack.c.l.b16 %v85
    %v375 = vunpack.c.l.b16 %v86
    %v376 = vunpack.c.l.b16 %v87
    %v377 = vunpack.c.l.b16 %v88
    %v378 = vunpack.c.l.b16 %v89
    %v379 = vunpack.c.l.b16 %v90
    %v380 = vunpack.c.l.b16 %v91
    %v381 = vunpack.c.l.b16 %v92
    %v382 = vunpack.c.l.b16 %v93
    %v383 = vunpack.c.l.b16 %v94
    %v384 = vunpack.c.l.b16 %v95
    %v385 = vunpack.c.l.b16 %v96
    %v386 = vunpack.c.l.b16 %v97
    %v387 = vunpack.c.l.b16 %v98
    %v388 = vunpack.c.l.b16 %v99
    %v389 = vunpack.c.l.b16 %v100
    %v390 = vunpack.c.l.b16 %v101
    %v391 = vunpack.c.l.b16 %v102
    %v392 = vunpack.c.l.b16 %v103
    %v393 = vunpack.c.l.b16 %v104
    %v394 = vunpack.c.l.b16 %v105
    %v395 = vunpack.c.l.b16 %v106
    %v396 = vunpack.c.l.b16 %v107
    %v397 = vunpack.c.l.b16 %v108
    %v398 = vunpack.c.l.b16 %v109
    %v399 = vunpack.c.l.b16 %v110
    %v400 = vunpack.c.l.b16 %v111
    %v401 = vunpack.c.l.b16 %v112
    %v402 = vunpack.c.l.b16 %v113
    %v403 = vunpack.c.l.b16 %v114
    %v404 = vunpack.c.l.b16 %v115
    %v405 = vunpack.c.l.b16 %v116
    %v406 = vunpack.c.l.b16 %v117
    %v407 = vunpack.c.l.b16 %v118
    %v408 = vunpack.c.l.b16 %v119
    %v409 = vunpack.c.l.b16 %v120
    %v410 = vunpack.c.l.b16 %v121
    %v411 = vunpack.c.l.b16 %v122
    %v412 = vunpack.c.l.b16 %v123
    %v413 = vunpack.c.l.b16 %v124
    %v414 = vunpack.c.l.b16 %v125
    %v415 = vunpack.c.l.b16 %v126
    %v416 = vunpack.c.l.b16 %v127
    %v417 = vunpack.c.l.b16 %v128
    %v418 = vunpack.c.l.b16 %v129
    %v419 = vunpack.c.l.b16 %v130
    %v420 = vunpack.c.l.b16 %v131
    %v421 = vunpack.c.l.b16 %v132
    %v422 = vunpack.c.l.b16 %v133
    %v423 = vunpack.c.l.b16 %v134
    %v424 = vunpack.c.l.b16 %v135
    %v425 = vunpack.c.l.b16 %v136
    %v426 = vunpack.c.l.b16 %v137
    %v427 = vunpack.c.l.b16 %v138
    %v428 = vunpack.c.l.b16 %v139
    %v429 = vunpack.c.l.b16 %v140
    %v430 = vunpack.c.l.b16 %v141
    %v431 = vunpack.c.l.b16 %v142
    %v432 = vunpack.c.l.b16 %v143
    %v433 = vunpack.c.l.b16 %v144
    %v434 = vunpack.c.l.b16 %v145
    %v435 = vunpack.c.l.b16 %v146
    %v436 = vunpack.c.l.b16 %v147
    %v437 = vunpack.c.l.b16 %v148
    %v438 = vunpack.c.l.b16 %v149
    %v439 = vunpack.c.l.b16 %v150
    %v440 = vunpack.c.l.b16 %v151
    %v441 = vunpack.c.l.b16 %v152
    %v442 = vunpack.c.l.b16 %v153
    %v443 = vunpack.c.l.b16 %v154
    %v444 = vunpack.c.l.b16 %v155
    %v445 = vunpack.c.l.b16 %v156
    %v446 = vunpack.c.l.b16 %v157
    %v447 = vunpack.c.l.b16 %v158
    %v448 = vunpack.c.l.b16 %v159
    %v449 = vunpack.c.l.b16 %v160
    %v450 = vunpack.c.l.b16 %v161
    %v451 = vunpack.c.l.b16 %v162
    %v452 = vunpack.c.l.b16 %v163
    %v453 = vunpack.c.l.b16 %v164
    %v454 = vunpack.c.l.b16 %v165
    %v455 = vunpack.c.l.b16 %v166
    %v456 = vunpack.c.l.b16 %v167
    %v457 = vunpack.c.l.b16 %v168
    %v458 = vunpack.c.l.b16 %v169
    %v459 = vunpack.c.l.b16 %v170
    %v460 = vunpack.c.l.b16 %v171
    %v461 = vunpack.c.l.b16 %v172
    %v462 = vunpack.c.l.b16 %v173
    %v463 = vunpack.c.l.b16 %v174
    %v464 = vunpack.c.l.b16 %v175
    %v465 = vunpack.c.l.b16 %v176
    %v466 = vunpack.c.l.b16 %v177
    %v467 = vunpack.c.l.b16 %v178
    %v468 = vunpack.c.l.b16 %v179
    %v469 = vunpack.c.l.b16 %v180
    %v470 = vunpack.c.l.b16 %v181
    %v471 = vunpack.c.l.b16 %v182
    %v472 = vunpack.c.l.b16 %v183
    %v473 = vunpack.c.l.b16 %v184
    %v474 = vunpack.c.l.b16 %v185
    %v475 = vunpack.c.l.b16 %v186
    %v476 = vpack.c.b16 %v349, %v348
    %v477 = vpack.c.b16 %v351, %v350
    %v478 = vpack.c.b16 %v353, %v352
    %v479 = vpack.c.b16 %v355, %v354
    %v480 = vpack.c.b16 %v357, %v356
    %v481 = vpack.c.b16 %v359, %v358
    %v482 = vpack.c.b16 %v361, %v360
    %v483 = vpack.c.b16 %v363, %v362
    %v484 = vpack.c.b16 %v365, %v364
    %v485 = vpack.c.b16 %v367, %v366
    %v486 = vpack.c.b16 %v369, %v368
    %v487 = vpack.c.b16 %v371, %v370
    %v488 = vpack.c.b16 %v373, %v372
    %v489 = vpack.c.b16 %v375, %v374
    %v490 = vpack.c.b16 %v377, %v376
    %v491 = vpack.c.b16 %v379, %v378
    %v492 = vpack.c.b16 %v381, %v380
    %v493 = vpack.c.b16 %v383, %v382
    %v494 = vpack.c.b16 %v385, %v384
    %v495 = vpack.c.b16 %v387, %v386
    %v496 = vpack.c.b16 %v389, %v388
    %v497 = vpack.c.b16 %v391, %v390
    %v498 = vpack.c.b16 %v393, %v392
    %v499 = vpack.c.b16 %v395, %v394
    %v500 = vpack.c.b16 %v397, %v396
    %v501 = vpack.c.b16 %v399, %v398
    %v502 = vpack.c.b16 %v401, %v400
    %v503 = vpack.c.b16 %v403, %v402
    %v504 = vpack.c.b16 %v405, %v404
    %v505 = vpack.c.b16 %v407, %v406
    %v506 = vpack.c.b16 %v409, %v408
    %v507 = vpack.c.b16 %v411, %v410
    %v508 = vpack.c.b16 %v413, %v412
    %v509 = vpack.c.b16 %v415, %v414
    %v510 = vpack.c.b16 %v417, %v416
    %v511 = vpack.c.b16 %v419, %v418
    %v512 = vpack.c.b16 %v421, %v420
    %v513 = vpack.c.b16 %v423, %v422
    %v514 = vpack.c.b16 %v425, %v424
    %v515 = vpack.c.b16 %v427, %v426
    %v516 = vpack.c.b16 %v429, %v428
    %v517 = vpack.c.b16 %v431, %v430
    %v518 = vpack.c.b16 %v433, %v432
    %v519 = vpack.c.b16 %v435, %v434
    %v520 = vpack.c.b16 %v437, %v436
    %v521 = vpack.c.b16 %v439, %v438
    %v522 = vpack.c.b16 %v441, %v440
    %v523 = vpack.c.b16 %v443, %v442
    %v524 = vpack.c.b16 %v445, %v444
    %v525 = vpack.c.b16 %v447, %v446
    %v526 = vpack.c.b16 %v449, %v448
    %v527 = vpack.c.b16 %v451, %v450
    %v528 = vpack.c.b16 %v453, %v452
    %v529 = vpack.c.b16 %v455, %v454
    %v530 = vpack.c.b16 %v457, %v456
    %v531 = vpack.c.b16 %v459, %v458
    %v532 = vpack.c.b16 %v461, %v460
    %v533 = vpack.c.b16 %v463, %v462
    %v534 = vpack.c.b16 %v465, %v464
    %v535 = vpack.c.b16 %v467, %v466
    %v536 = vpack.c.b16 %v469, %v468
    %v537 = vpack.c.b16 %v471, %v470
    %v538 = vpack.c.b16 %v473, %v472
    %v539 = vpack.c.b16 %v475, %v474
    %604 = vmatprep.subr.bf16.mxu0 0
    %605 = vmatpush1.bf16.msra.mxu0 %v476
    %606 = vmatprep.subr.bf16.mxu0 0
    %607 = vmatpush1.bf16.msra.mxu0 %v477
    %608 = vmatprep.subr.bf16.mxu0 0
    %609 = vmatpush1.bf16.msra.mxu0 %v478
    %610 = vmatprep.subr.bf16.mxu0 0
    %611 = vmatpush1.bf16.msra.mxu0 %v479
    %612 = vmatprep.subr.bf16.mxu0 0
    %613 = vmatpush1.bf16.msra.mxu0 %v480
    %614 = vmatprep.subr.bf16.mxu0 0
    %615 = vmatpush1.bf16.msra.mxu0 %v481
    %616 = vmatprep.subr.bf16.mxu0 0
    %617 = vmatpush1.bf16.msra.mxu0 %v482
    %618 = vmatprep.subr.bf16.mxu0 0
    %619 = vmatpush1.bf16.msra.mxu0 %v483
    %620 = vmatprep.subr.bf16.mxu0 0
    %621 = vmatpush1.bf16.msra.mxu0 %v484
    %622 = vmatprep.subr.bf16.mxu0 0
    %623 = vmatpush1.bf16.msra.mxu0 %v485
    %624 = vmatprep.subr.bf16.mxu0 0
    %625 = vmatpush1.bf16.msra.mxu0 %v486
    %626 = vmatprep.subr.bf16.mxu0 0
    %627 = vmatpush1.bf16.msra.mxu0 %v487
    %628 = vmatprep.subr.bf16.mxu0 0
    %629 = vmatpush1.bf16.msra.mxu0 %v488
    %630 = vmatprep.subr.bf16.mxu0 0
    %631 = vmatpush1.bf16.msra.mxu0 %v489
    %632 = vmatprep.subr.bf16.mxu0 0
    %633 = vmatpush1.bf16.msra.mxu0 %v490
    %634 = vmatprep.subr.bf16.mxu0 0
    %635 = vmatpush1.bf16.msra.mxu0 %v491
    %636 = vmatprep.mubr.bf16.mxu0 %v205
    %637 = vmatmul.mubr.bf16.gmra.mrb[0].mxu0 %v204
    %v638 = vpop.f32.mrb[0].mxu0
    %v639 = vadd.f32 %v191, %v638
    %v640 = vpop.f32.mrb[0].mxu0
    %v641 = vpop.f32.mrb[0].mxu0
    %v642 = vpop.f32.mrb[0].mxu0
    %643 = vdwg.mxu0
    %644 = vmatprep.subr.bf16.mxu0 0
    %645 = vmatpush1.bf16.msra.mxu0 %v492
    %646 = vmatprep.subr.bf16.mxu0 0
    %647 = vmatpush1.bf16.msra.mxu0 %v493
    %648 = vmatprep.subr.bf16.mxu0 0
    %649 = vmatpush1.bf16.msra.mxu0 %v494
    %650 = vmatprep.subr.bf16.mxu0 0
    %651 = vmatpush1.bf16.msra.mxu0 %v495
    %652 = vmatprep.subr.bf16.mxu0 0
    %653 = vmatpush1.bf16.msra.mxu0 %v496
    %654 = vmatprep.subr.bf16.mxu0 0
    %655 = vmatpush1.bf16.msra.mxu0 %v497
    %656 = vmatprep.subr.bf16.mxu0 0
    %657 = vmatpush1.bf16.msra.mxu0 %v498
    %658 = vmatprep.subr.bf16.mxu0 0
    %659 = vmatpush1.bf16.msra.mxu0 %v499
    %660 = vmatprep.subr.bf16.mxu0 0
    %661 = vmatpush1.bf16.msra.mxu0 %v500
    %662 = vmatprep.subr.bf16.mxu0 0
    %663 = vmatpush1.bf16.msra.mxu0 %v501
    %664 = vmatprep.subr.bf16.mxu0 0
    %665 = vmatpush1.bf16.msra.mxu0 %v502
    %666 = vmatprep.subr.bf16.mxu0 0
    %667 = vmatpush1.bf16.msra.mxu0 %v503
    %668 = vmatprep.subr.bf16.mxu0 0
    %669 = vmatpush1.bf16.msra.mxu0 %v504
    %670 = vmatprep.subr.bf16.mxu0 0
    %671 = vmatpush1.bf16.msra.mxu0 %v505
    %672 = vmatprep.subr.bf16.mxu0 0
    %673 = vmatpush1.bf16.msra.mxu0 %v506
    %674 = vmatprep.subr.bf16.mxu0 0
    %675 = vmatpush1.bf16.msra.mxu0 %v507
    %676 = vmatprep.mubr.bf16.mxu0 %v207
    %677 = vmatmul.mubr.bf16.gmra.mrb[0].mxu0 %v206
    %v678 = vpop.f32.mrb[0].mxu0
    %v679 = vadd.f32 %v639, %v678
    %v680 = vpop.f32.mrb[0].mxu0
    %v681 = vpop.f32.mrb[0].mxu0
    %v682 = vpop.f32.mrb[0].mxu0
    %683 = vdwg.mxu0
    %684 = vmatprep.subr.bf16.mxu0 0
    %685 = vmatpush1.bf16.msra.mxu0 %v508
    %686 = vmatprep.subr.bf16.mxu0 0
    %687 = vmatpush1.bf16.msra.mxu0 %v509
    %688 = vmatprep.subr.bf16.mxu0 0
    %689 = vmatpush1.bf16.msra.mxu0 %v510
    %690 = vmatprep.subr.bf16.mxu0 0
    %691 = vmatpush1.bf16.msra.mxu0 %v511
    %692 = vmatprep.subr.bf16.mxu0 0
    %693 = vmatpush1.bf16.msra.mxu0 %v512
    %694 = vmatprep.subr.bf16.mxu0 0
    %695 = vmatpush1.bf16.msra.mxu0 %v513
    %696 = vmatprep.subr.bf16.mxu0 0
    %697 = vmatpush1.bf16.msra.mxu0 %v514
    %698 = vmatprep.subr.bf16.mxu0 0
    %699 = vmatpush1.bf16.msra.mxu0 %v515
    %700 = vmatprep.subr.bf16.mxu0 0
    %701 = vmatpush1.bf16.msra.mxu0 %v516
    %702 = vmatprep.subr.bf16.mxu0 0
    %703 = vmatpush1.bf16.msra.mxu0 %v517
    %704 = vmatprep.subr.bf16.mxu0 0
    %705 = vmatpush1.bf16.msra.mxu0 %v518
    %706 = vmatprep.subr.bf16.mxu0 0
    %707 = vmatpush1.bf16.msra.mxu0 %v519
    %708 = vmatprep.subr.bf16.mxu0 0
    %709 = vmatpush1.bf16.msra.mxu0 %v520
    %710 = vmatprep.subr.bf16.mxu0 0
    %711 = vmatpush1.bf16.msra.mxu0 %v521
    %712 = vmatprep.subr.bf16.mxu0 0
    %713 = vmatpush1.bf16.msra.mxu0 %v522
    %714 = vmatprep.subr.bf16.mxu0 0
    %715 = vmatpush1.bf16.msra.mxu0 %v523
    %716 = vmatprep.mubr.bf16.mxu0 %v209
    %717 = vmatmul.mubr.bf16.gmra.mrb[0].mxu0 %v208
    %v718 = vpop.f32.mrb[0].mxu0
    %v719 = vadd.f32 %v679, %v718
    %v720 = vpop.f32.mrb[0].mxu0
    %v721 = vpop.f32.mrb[0].mxu0
    %v722 = vpop.f32.mrb[0].mxu0
    %723 = vdwg.mxu0
    %724 = vmatprep.subr.bf16.mxu0 0
    %725 = vmatpush1.bf16.msra.mxu0 %v524
    %726 = vmatprep.subr.bf16.mxu0 0
    %727 = vmatpush1.bf16.msra.mxu0 %v525
    %728 = vmatprep.subr.bf16.mxu0 0
    %729 = vmatpush1.bf16.msra.mxu0 %v526
    %730 = vmatprep.subr.bf16.mxu0 0
    %731 = vmatpush1.bf16.msra.mxu0 %v527
    %732 = vmatprep.subr.bf16.mxu0 0
    %733 = vmatpush1.bf16.msra.mxu0 %v528
    %734 = vmatprep.subr.bf16.mxu0 0
    %735 = vmatpush1.bf16.msra.mxu0 %v529
    %736 = vmatprep.subr.bf16.mxu0 0
    %737 = vmatpush1.bf16.msra.mxu0 %v530
    %738 = vmatprep.subr.bf16.mxu0 0
    %739 = vmatpush1.bf16.msra.mxu0 %v531
    %740 = vmatprep.subr.bf16.mxu0 0
    %741 = vmatpush1.bf16.msra.mxu0 %v532
    %742 = vmatprep.subr.bf16.mxu0 0
    %743 = vmatpush1.bf16.msra.mxu0 %v533
    %744 = vmatprep.subr.bf16.mxu0 0
    %745 = vmatpush1.bf16.msra.mxu0 %v534
    %746 = vmatprep.subr.bf16.mxu0 0
    %747 = vmatpush1.bf16.msra.mxu0 %v535
    %748 = vmatprep.subr.bf16.mxu0 0
    %749 = vmatpush1.bf16.msra.mxu0 %v536
    %750 = vmatprep.subr.bf16.mxu0 0
    %751 = vmatpush1.bf16.msra.mxu0 %v537
    %752 = vmatprep.subr.bf16.mxu0 0
    %753 = vmatpush1.bf16.msra.mxu0 %v538
    %754 = vmatprep.subr.bf16.mxu0 0
    %755 = vmatpush1.bf16.msra.mxu0 %v539
    %756 = vmatprep.mubr.bf16.mxu0 %v211
    %757 = vmatmul.mubr.bf16.gmra.mrb[0].mxu0 %v210
    %v758 = vpop.f32.mrb[0].mxu0
    %v759 = vadd.f32 %v719, %v758
    %v760 = vpop.f32.mrb[0].mxu0
    %v761 = vpop.f32.mrb[0].mxu0
    %v762 = vpop.f32.mrb[0].mxu0
    %763 = vdwg.mxu0
    %v764 = vld [vmem:[#allocation7] sm:$0xff]
    %v765 = vld [vmem:[#allocation7 + $0x8] sm:$0xff]
    %v766 = vld [vmem:[#allocation7 + $0x10] sm:$0xff]
    %v767 = vld [vmem:[#allocation7 + $0x18] sm:$0xff]
    %v768 = vld [vmem:[#allocation7 + $0x20] sm:$0xff]
    %v769 = vld [vmem:[#allocation7 + $0x28] sm:$0xff]
    %v770 = vld [vmem:[#allocation7 + $0x30] sm:$0xff]
    %v771 = vld [vmem:[#allocation7 + $0x38] sm:$0xff]
    %v772 = vld [vmem:[#allocation7 + $0x40] sm:$0xff]
    %v773 = vld [vmem:[#allocation7 + $0x48] sm:$0xff]
    %v774 = vld [vmem:[#allocation7 + $0x50] sm:$0xff]
    %v775 = vld [vmem:[#allocation7 + $0x58] sm:$0xff]
    %v776 = vld [vmem:[#allocation7 + $0x60] sm:$0xff]
    %v777 = vld [vmem:[#allocation7 + $0x68] sm:$0xff]
    %v778 = vld [vmem:[#allocation7 + $0x70] sm:$0xff]
    %v779 = vld [vmem:[#allocation7 + $0x78] sm:$0xff]
    %v780 = vld [vmem:[#allocation7 + $0x88] sm:$0x1]
    %v781 = vlaneseq
    %v782 = vshrl.u32 %v781, 7
    %v783 = vsub.s32 0, %v782
    %v784 = vrot.slane %v780, %v783
    %785 = vmatprep.subr.mxu0 0.0
    %786 = vmatpush1.msra.mxu0 %v764
    %787 = vmatprep.subr.mxu0 0.0
    %788 = vmatpush1.msra.mxu0 %v765
    %789 = vmatprep.subr.mxu0 0.0
    %790 = vmatpush1.msra.mxu0 %v766
    %791 = vmatprep.subr.mxu0 0.0
    %792 = vmatpush1.msra.mxu0 %v767
    %793 = vmatprep.subr.mxu0 0.0
    %794 = vmatpush1.msra.mxu0 %v768
    %795 = vmatprep.subr.mxu0 0.0
    %796 = vmatpush1.msra.mxu0 %v769
    %797 = vmatprep.subr.mxu0 0.0
    %798 = vmatpush1.msra.mxu0 %v770
    %799 = vmatprep.subr.mxu0 0.0
    %800 = vmatpush1.msra.mxu0 %v771
    %801 = vmatprep.subr.mxu0 0.0
    %802 = vmatpush1.msra.mxu0 %v772
    %803 = vmatprep.subr.mxu0 0.0
    %804 = vmatpush1.msra.mxu0 %v773
    %805 = vmatprep.subr.mxu0 0.0
    %806 = vmatpush1.msra.mxu0 %v774
    %807 = vmatprep.subr.mxu0 0.0
    %808 = vmatpush1.msra.mxu0 %v775
    %809 = vmatprep.subr.mxu0 0.0
    %810 = vmatpush1.msra.mxu0 %v776
    %811 = vmatprep.subr.mxu0 0.0
    %812 = vmatpush1.msra.mxu0 %v777
    %813 = vmatprep.subr.mxu0 0.0
    %814 = vmatpush1.msra.mxu0 %v778
    %815 = vmatprep.subr.mxu0 0.0
    %816 = vmatpush1.msra.mxu0 %v779
    %817 = vmatprep.subr.mxu0 0.0
    %818 = vmatpush1.msra.mxu0 0.0
    %819 = vmatprep.subr.mxu0 0.0
    %820 = vmatpush1.msra.mxu0 0.0
    %821 = vmatprep.subr.mxu0 0.0
    %822 = vmatpush1.msra.mxu0 0.0
    %823 = vmatprep.subr.mxu0 0.0
    %824 = vmatpush1.msra.mxu0 0.0
    %825 = vmatprep.subr.mxu0 0.0
    %826 = vmatpush1.msra.mxu0 0.0
    %827 = vmatprep.subr.mxu0 0.0
    %828 = vmatpush1.msra.mxu0 0.0
    %829 = vmatprep.subr.mxu0 0.0
    %830 = vmatpush1.msra.mxu0 0.0
    %831 = vmatprep.subr.mxu0 0.0
    %832 = vmatpush1.msra.mxu0 0.0
    %833 = vmatprep.subr.mxu0 0.0
    %834 = vmatpush1.msra.mxu0 0.0
    %835 = vmatprep.subr.mxu0 0.0
    %836 = vmatpush1.msra.mxu0 0.0
    %837 = vmatprep.subr.mxu0 0.0
    %838 = vmatpush1.msra.mxu0 0.0
    %839 = vmatprep.subr.mxu0 0.0
    %840 = vmatpush1.msra.mxu0 0.0
    %841 = vmatprep.subr.mxu0 0.0
    %842 = vmatpush1.msra.mxu0 0.0
    %843 = vmatprep.subr.mxu0 0.0
    %844 = vmatpush1.msra.mxu0 0.0
    %845 = vmatprep.subr.mxu0 0.0
    %846 = vmatpush1.msra.mxu0 0.0
    %847 = vmatprep.subr.mxu0 0.0
    %848 = vmatpush1.msra.mxu0 0.0
    %849 = vmatprep.mubr.f32.mxu0 0.0
    %850 = vmatmul.mubr.f32.gmra.mrb[0].mxu0 %v759
    %v851 = vpop.f32.mrb[0].mxu0
    %v852 = vadd.f32 %v784, %v851
    %v853 = vpop.f32.mrb[0].mxu0
    %854 = vdwg.mxu0
    %v855 = vmax.f32 %v852, 0.0
    %v856 = vld [vmem:[#allocation7 + $0xa0] sm:$0xff]
    %v857 = vld [vmem:[#allocation7 + $0xa8] sm:$0xff]
    %v858 = vld [vmem:[#allocation7 + $0xb0] sm:$0xff]
    %v859 = vld [vmem:[#allocation7 + $0xb8] sm:$0xff]
    %v860 = vld [vmem:[#allocation7 + $0xc0] sm:$0xff]
    %v861 = vld [vmem:[#allocation7 + $0xc8] sm:$0xff]
    %v862 = vld [vmem:[#allocation7 + $0xd0] sm:$0xff]
    %v863 = vld [vmem:[#allocation7 + $0xd8] sm:$0xff]
    %v864 = vld [vmem:[#allocation7 + $0xe0] sm:$0xff]
    %v865 = vld [vmem:[#allocation7 + $0xe8] sm:$0xff]
    %v866 = vld [vmem:[#allocation7 + $0xf0] sm:$0xff]
    %v867 = vld [vmem:[#allocation7 + $0xf8] sm:$0xff]
    %v868 = vld [vmem:[#allocation7 + $0x100] sm:$0xff]
    %v869 = vld [vmem:[#allocation7 + $0x108] sm:$0xff]
    %v870 = vld [vmem:[#allocation7 + $0x110] sm:$0xff]
    %v871 = vld [vmem:[#allocation7 + $0x118] sm:$0xff]
    %v872 = vld [vmem:[#allocation7 + $0x90] sm:$0x1]
    %v873 = vlaneseq
    %v874 = vshrl.u32 %v873, 7
    %v875 = vsub.s32 0, %v874
    %v876 = vrot.slane %v872, %v875
    %877 = vmatprep.subr.mxu0 0.0
    %878 = vmatpush1.msra.mxu0 %v856
    %879 = vmatprep.subr.mxu0 0.0
    %880 = vmatpush1.msra.mxu0 %v857
    %881 = vmatprep.subr.mxu0 0.0
    %882 = vmatpush1.msra.mxu0 %v858
    %883 = vmatprep.subr.mxu0 0.0
    %884 = vmatpush1.msra.mxu0 %v859
    %885 = vmatprep.subr.mxu0 0.0
    %886 = vmatpush1.msra.mxu0 %v860
    %887 = vmatprep.subr.mxu0 0.0
    %888 = vmatpush1.msra.mxu0 %v861
    %889 = vmatprep.subr.mxu0 0.0
    %890 = vmatpush1.msra.mxu0 %v862
    %891 = vmatprep.subr.mxu0 0.0
    %892 = vmatpush1.msra.mxu0 %v863
    %893 = vmatprep.subr.mxu0 0.0
    %894 = vmatpush1.msra.mxu0 %v864
    %895 = vmatprep.subr.mxu0 0.0
    %896 = vmatpush1.msra.mxu0 %v865
    %897 = vmatprep.subr.mxu0 0.0
    %898 = vmatpush1.msra.mxu0 %v866
    %899 = vmatprep.subr.mxu0 0.0
    %900 = vmatpush1.msra.mxu0 %v867
    %901 = vmatprep.subr.mxu0 0.0
    %902 = vmatpush1.msra.mxu0 %v868
    %903 = vmatprep.subr.mxu0 0.0
    %904 = vmatpush1.msra.mxu0 %v869
    %905 = vmatprep.subr.mxu0 0.0
    %906 = vmatpush1.msra.mxu0 %v870
    %907 = vmatprep.subr.mxu0 0.0
    %908 = vmatpush1.msra.mxu0 %v871
    %909 = vmatprep.subr.mxu0 0.0
    %910 = vmatpush1.msra.mxu0 0.0
    %911 = vmatprep.subr.mxu0 0.0
    %912 = vmatpush1.msra.mxu0 0.0
    %913 = vmatprep.subr.mxu0 0.0
    %914 = vmatpush1.msra.mxu0 0.0
    %915 = vmatprep.subr.mxu0 0.0
    %916 = vmatpush1.msra.mxu0 0.0
    %917 = vmatprep.subr.mxu0 0.0
    %918 = vmatpush1.msra.mxu0 0.0
    %919 = vmatprep.subr.mxu0 0.0
    %920 = vmatpush1.msra.mxu0 0.0
    %921 = vmatprep.subr.mxu0 0.0
    %922 = vmatpush1.msra.mxu0 0.0
    %923 = vmatprep.subr.mxu0 0.0
    %924 = vmatpush1.msra.mxu0 0.0
    %925 = vmatprep.subr.mxu0 0.0
    %926 = vmatpush1.msra.mxu0 0.0
    %927 = vmatprep.subr.mxu0 0.0
    %928 = vmatpush1.msra.mxu0 0.0
    %929 = vmatprep.subr.mxu0 0.0
    %930 = vmatpush1.msra.mxu0 0.0
    %931 = vmatprep.subr.mxu0 0.0
    %932 = vmatpush1.msra.mxu0 0.0
    %933 = vmatprep.subr.mxu0 0.0
    %934 = vmatpush1.msra.mxu0 0.0
    %935 = vmatprep.subr.mxu0 0.0
    %936 = vmatpush1.msra.mxu0 0.0
    %937 = vmatprep.subr.mxu0 0.0
    %938 = vmatpush1.msra.mxu0 0.0
    %939 = vmatprep.subr.mxu0 0.0
    %940 = vmatpush1.msra.mxu0 0.0
    %941 = vmatprep.mubr.f32.mxu0 0.0
    %942 = vmatmul.mubr.f32.gmra.mrb[0].mxu0 %v855
    %v943 = vpop.f32.mrb[0].mxu0
    %v944 = vadd.f32 %v876, %v943
    %v945 = vpop.f32.mrb[0].mxu0
    %946 = vdwg.mxu0
    %v947 = vmax.f32 %v944, 0.0
    %v948 = vld [vmem:[#allocation7 + $0x120] sm:$0xff]
    %v949 = vld [vmem:[#allocation7 + $0x128] sm:$0xff]
    %v950 = vld [vmem:[#allocation7 + $0x130] sm:$0xff]
    %v951 = vld [vmem:[#allocation7 + $0x138] sm:$0xff]
    %v952 = vld [vmem:[#allocation7 + $0x140] sm:$0xff]
    %v953 = vld [vmem:[#allocation7 + $0x148] sm:$0xff]
    %v954 = vld [vmem:[#allocation7 + $0x150] sm:$0xff]
    %v955 = vld [vmem:[#allocation7 + $0x158] sm:$0xff]
    %v956 = vld [vmem:[#allocation7 + $0x160] sm:$0xff]
    %v957 = vld [vmem:[#allocation7 + $0x168] sm:$0xff]
    %v958 = vld [vmem:[#allocation7 + $0x170] sm:$0xff]
    %v959 = vld [vmem:[#allocation7 + $0x178] sm:$0xff]
    %v960 = vld [vmem:[#allocation7 + $0x180] sm:$0xff]
    %v961 = vld [vmem:[#allocation7 + $0x188] sm:$0xff]
    %v962 = vld [vmem:[#allocation7 + $0x190] sm:$0xff]
    %v963 = vld [vmem:[#allocation7 + $0x198] sm:$0xff]
    %v964 = vld [vmem:[#allocation7 + $0x98] sm:$0x1]
    %v965 = vlaneseq
    %v966 = vshrl.u32 %v965, 7
    %v967 = vsub.s32 0, %v966
    %v968 = vrot.slane %v964, %v967
    %969 = vmatprep.subr.mxu0 0.0
    %970 = vmatpush1.msra.mxu0 %v948
    %971 = vmatprep.subr.mxu0 0.0
    %972 = vmatpush1.msra.mxu0 %v949
    %973 = vmatprep.subr.mxu0 0.0
    %974 = vmatpush1.msra.mxu0 %v950
    %975 = vmatprep.subr.mxu0 0.0
    %976 = vmatpush1.msra.mxu0 %v951
    %977 = vmatprep.subr.mxu0 0.0
    %978 = vmatpush1.msra.mxu0 %v952
    %979 = vmatprep.subr.mxu0 0.0
    %980 = vmatpush1.msra.mxu0 %v953
    %981 = vmatprep.subr.mxu0 0.0
    %982 = vmatpush1.msra.mxu0 %v954
    %983 = vmatprep.subr.mxu0 0.0
    %984 = vmatpush1.msra.mxu0 %v955
    %985 = vmatprep.subr.mxu0 0.0
    %986 = vmatpush1.msra.mxu0 %v956
    %987 = vmatprep.subr.mxu0 0.0
    %988 = vmatpush1.msra.mxu0 %v957
    %989 = vmatprep.subr.mxu0 0.0
    %990 = vmatpush1.msra.mxu0 %v958
    %991 = vmatprep.subr.mxu0 0.0
    %992 = vmatpush1.msra.mxu0 %v959
    %993 = vmatprep.subr.mxu0 0.0
    %994 = vmatpush1.msra.mxu0 %v960
    %995 = vmatprep.subr.mxu0 0.0
    %996 = vmatpush1.msra.mxu0 %v961
    %997 = vmatprep.subr.mxu0 0.0
    %998 = vmatpush1.msra.mxu0 %v962
    %999 = vmatprep.subr.mxu0 0.0
    %1000 = vmatpush1.msra.mxu0 %v963
    %1001 = vmatprep.subr.mxu0 0.0
    %1002 = vmatpush1.msra.mxu0 0.0
    %1003 = vmatprep.subr.mxu0 0.0
    %1004 = vmatpush1.msra.mxu0 0.0
    %1005 = vmatprep.subr.mxu0 0.0
    %1006 = vmatpush1.msra.mxu0 0.0
    %1007 = vmatprep.subr.mxu0 0.0
    %1008 = vmatpush1.msra.mxu0 0.0
    %1009 = vmatprep.subr.mxu0 0.0
    %1010 = vmatpush1.msra.mxu0 0.0
    %1011 = vmatprep.subr.mxu0 0.0
    %1012 = vmatpush1.msra.mxu0 0.0
    %1013 = vmatprep.subr.mxu0 0.0
    %1014 = vmatpush1.msra.mxu0 0.0
    %1015 = vmatprep.subr.mxu0 0.0
    %1016 = vmatpush1.msra.mxu0 0.0
    %1017 = vmatprep.subr.mxu0 0.0
    %1018 = vmatpush1.msra.mxu0 0.0
    %1019 = vmatprep.subr.mxu0 0.0
    %1020 = vmatpush1.msra.mxu0 0.0
    %1021 = vmatprep.subr.mxu0 0.0
    %1022 = vmatpush1.msra.mxu0 0.0
    %1023 = vmatprep.subr.mxu0 0.0
    %1024 = vmatpush1.msra.mxu0 0.0
    %1025 = vmatprep.subr.mxu0 0.0
    %1026 = vmatpush1.msra.mxu0 0.0
    %1027 = vmatprep.subr.mxu0 0.0
    %1028 = vmatpush1.msra.mxu0 0.0
    %1029 = vmatprep.subr.mxu0 0.0
    %1030 = vmatpush1.msra.mxu0 0.0
    %1031 = vmatprep.subr.mxu0 0.0
    %1032 = vmatpush1.msra.mxu0 0.0
    %1033 = vmatprep.mubr.f32.mxu0 0.0
    %1034 = vmatmul.mubr.f32.gmra.mrb[0].mxu0 %v947
    %v1035 = vpop.f32.mrb[0].mxu0
    %v1036 = vadd.f32 %v968, %v1035
    %v1037 = vpop.f32.mrb[0].mxu0
    %1038 = vdwg.mxu0
    %1039 = vst [vmem:[#allocation8] sm:$0xff] %v1036
    // Predicated region
    $region26: #{tpu_custom_call.1} parent=1 // pred_check
      _
    $region27: #{tpu_custom_call.1} parent=1 // pred_check_branch
      %1041 = sbr.rel (0) target = $region29
    $region28: #{tpu_custom_call.1} parent=1 // pred_region
      %s1043 = ssub.s32 128, 128
      %1044 = vsyncadd [#allocation4], %s1043
      %s1046 = sshll.u32 [#allocation8], 4
      %s1047 = int_to_ptr.vmem [resolvable:$true] %s1046
      %1049 = dma.vmem_to_hbm [thread:$0]  %s1047, 128, %s3, [#allocation4]
    $region29: #{tpu_custom_call.1} parent=1 // pred_fallthru
      _
    // Predicated region
    $region30: #{tpu_custom_call.1} parent=1 // pred_check
      _
    $region31: #{tpu_custom_call.1} parent=1 // pred_check_branch
      %1051 = sbr.rel (0) target = $region33
    $region32: #{tpu_custom_call.1} parent=1 // pred_region
      %1052 = dma.done [#allocation4], 128
    $region33: #{tpu_custom_call.1} parent=1 // pred_fallthru
      _
    %1053 = vsyncpa [#allocation3], 1
    %1054 = vsyncpa [#allocation6], 1
    %1055 = vsyncpa [#allocation4], 1

</llo_original>
